<compile_context>
chip_gen: v7x
topology: tpu7x:2x2x1
jax: 0.10.0
libtpu: 0.0.40
codegen_flags: <defaults>
</compile_context>

<pallas_src>
import math

import jax
import jax.numpy as jnp
from jax import lax
from jax.experimental import pallas as pl
from jax.experimental.pallas import tpu as pltpu

HIDDEN = 50        # nn.Linear hidden size in NetWithDeriv
HIDDEN_PAD = 128   # zero-padded hidden size per net inside the kernel
N_IND = 8          # indicator lanes actually used in the 128-lane output row


# ------------------------- one-time Lambda kernel ---------------------------

def _dominant_eig_kernel(a_ref, out_ref):
    """Subspace iteration (8 chains) for the dominant eigenvalue of A."""
    a = a_ref[...]                                   # (D, D)
    d = a.shape[0]
    r = lax.broadcasted_iota(jnp.int32, (8, d), 0).astype(jnp.float32)
    c = lax.broadcasted_iota(jnp.int32, (8, d), 1).astype(jnp.float32)
    u0 = 1.0 + 0.05 * r + 0.02 * c + 0.003 * r * c   # 8 distinct start directions

    def body(_, u):
        w = jnp.dot(u, a, preferred_element_type=jnp.float32)
        inv = lax.rsqrt(jnp.sum(w * w, axis=-1, keepdims=True) + 1e-30)
        return w * inv

    u = lax.fori_loop(0, 48, body, u0)
    au = jnp.dot(u, a, preferred_element_type=jnp.float32)
    num = jnp.sum(u * au, axis=-1, keepdims=True)    # (8, 1) Rayleigh quotients
    den = jnp.sum(u * u, axis=-1, keepdims=True)
    out_ref[...] = num / den


@jax.jit
def dominant_eig(a):
    ray = pl.pallas_call(
        _dominant_eig_kernel,
        out_shape=jax.ShapeDtypeStruct((8, 1), jnp.float32),
        in_specs=[pl.BlockSpec(memory_space=pltpu.MemorySpace.VMEM)],
        out_specs=pl.BlockSpec(memory_space=pltpu.MemorySpace.VMEM),
    )(a)
    # TODO(synk): subspace iteration gives the largest-MAGNITUDE eigenvalue;
    # for A = 0.5(M+M^T)+I used here the spectrum is >= 0, so they coincide.
    return jnp.max(ray)


# --------------------------- fused step/rollout kernel -----------------------

def _build_step_kernel(h, alpha, threshold):
    H = float(h)
    ALPHA = float(alpha)
    THR = float(threshold)
    INV_H = 1.0 / H
    TWO_OVER_H = 2.0 / H
    HALF_H = 0.5 * H
    ALPHA_M3 = ALPHA - 3.0

    def kernel(scal_ref,                             # SMEM (4,)
               x0_ref, v0_ref, a_ref,                # VMEM state + Hessian
               w1_ref, b1_ref, w2_ref, b2_ref, w3_ref,   # per-net packed weights
               dx_ref, dv_ref, ind_ref,              # per-step outputs (VMEM)
               x_sc, v_sc):                          # VMEM scratch: carried state
        s = pl.program_id(0)
        t0 = scal_ref[0]
        lam = scal_ref[1]
        b3_beta = scal_ref[2]
        b3_gamma = scal_ref[3]
        step_f = lax.convert_element_type(s, jnp.float32)
        t = t0 + H * step_f

        @pl.when(s == 0)
        def _():
            x_sc[...] = x0_ref[...]
            v_sc[...] = v0_ref[...]

        x = x_sc[...]
        v = v_sc[...]
        # Independent MXU push issued first: its fill overlaps the net chain.
        df = jnp.dot(x, a_ref[...], preferred_element_type=jnp.float32)   # gradFunc(x)

        # time points on sublanes: row i = t + i*h (rows 0 and 1 are consumed)
        row = lax.broadcasted_iota(jnp.int32, (8, HIDDEN_PAD), 0).astype(jnp.float32)
        ts = t + H * row                                                  # (8, 128)

        def eval_net(idx):
            """NetWithDeriv forward + derivative at the 8 time rows.

            Returns (16, 128): rows 0..7 = values (no fc3 bias), rows 8..15 =
            derivatives; every lane of a row carries the same value
            (lane-broadcast fc3), so no scalar extraction is needed downstream.
            """
            w1 = w1_ref[idx:idx + 1, :]               # (1, 128)
            b1 = b1_ref[idx:idx + 1, :]
            w2 = w2_ref[idx]                          # (128, 128)  fc2.weight.T
            b2 = b2_ref[idx:idx + 1, :]
            w3 = w3_ref[idx]                          # (128, 128)  lane-broadcast fc3

            out1 = ts * w1 + b1
            e1 = jnp.exp(jnp.minimum(out1, 0.0))      # shared exp for ELU + grad
            h1 = jnp.where(out1 > 0.0, out1, e1 - 1.0)        # ELU(out1)
            g1 = jnp.where(out1 > 0.0, 1.0, e1)               # min(exp(out1), 1)
            d0 = g1 * w1

            cat1 = jnp.concatenate([h1, d0], axis=0)          # (16, 128)
            r1 = jnp.dot(cat1, w2, preferred_element_type=jnp.float32)
            out2 = r1[0:8, :] + b2
            d1 = r1[8:16, :]

            e2 = jnp.exp(jnp.minimum(out2, 0.0))
            h2 = jnp.where(out2 > 0.0, out2, e2 - 1.0)
            g2 = jnp.where(out2 > 0.0, 1.0, e2)
            d2 = g2 * d1

            cat2 = jnp.concatenate([h2, d2], axis=0)          # (16, 128)
            return jnp.dot(cat2, w3, preferred_element_type=jnp.float32)

        r3b = eval_net(0)        # beta net
        r3g = eval_net(1)        # gamma net

        beta_t = r3b[0:1, :] + b3_beta            # (1, 128) lane-broadcast
        beta_th = r3b[1:2, :] + b3_beta
        dbeta_t = r3b[8:9, :]
        dbeta_th = r3b[9:10, :]
        gamma_t = r3g[0:1, :] + b3_gamma
        gamma_th = r3g[1:2, :] + b3_gamma

        inv_t = 1.0 / t
        inv_th = 1.0 / (t + H)

        # ---------------- DIN-AVD vector field ----------------
        dx = -x + v - beta_t * df
        dv = (1.0 - ALPHA * inv_t) * dx + (dbeta_t - gamma_t) * df
        dx_ref[0] = dx
        dv_ref[0] = dv

        # carry (x, v) for the next fused step (explicit Euler)
        x_sc[...] = x + H * dx
        v_sc[...] = v + H * dv

        # ---------------- indicators, fully vectorized ----------------
        s1 = (beta_t - HALF_H * gamma_t) * lam + (ALPHA * inv_t - TWO_OVER_H)
        s2 = (H * gamma_t - beta_t) * lam - ALPHA * inv_t
        c1 = beta_t * inv_t + dbeta_t - gamma_t
        w_now = -c1
        w_nxt = -(beta_th * inv_th + dbeta_th - gamma_th)
        c2 = (t * INV_H) * (w_nxt - w_now) - ALPHA_M3 * w_now

        thr_t = THR * inv_t
        vals = (jnp.maximum(-beta_t, 0.0),
                jnp.maximum(-gamma_t, 0.0),
                jnp.maximum(s1 + thr_t, 0.0),
                jnp.maximum(s2 + thr_t, 0.0),
                jnp.maximum(c1, 0.0),
                jnp.maximum(c2, 0.0),
                beta_t,
                gamma_t)
        lane = lax.broadcasted_iota(jnp.int32, (8, HIDDEN_PAD), 1)
        ind_acc = jnp.zeros((8, HIDDEN_PAD), jnp.float32)
        for k, vk in enumerate(vals):
            ind_acc = jnp.where(lane == k, vk, ind_acc)
        ind_ref[0] = ind_acc                       # lane-dense (1,8,128) slab

    return kernel


# ------------------------------ wrappers / glue -------------------------------

def make_rollout(h, alpha, threshold, num_steps):
    """Fused trajectory: num_steps vector-field evaluations + Euler updates in
    ONE pallas_call; weights and Hessian stay VMEM-resident across the grid."""
    kernel = _build_step_kernel(h, alpha, threshold)
    num_steps = int(num_steps)

    @jax.jit
    def rollout(t0, x0, v0, packed, a, lam):
        w1, b1, w2t, b2, w3bc, b3 = packed
        n, d = x0.shape
        scal = jnp.stack([jnp.asarray(t0, jnp.float32).reshape(()),
                          jnp.asarray(lam, jnp.float32).reshape(()),
                          b3[0], b3[1]])
        dx_all, dv_all, ind_all = pl.pallas_call(
            kernel,
            out_shape=(jax.ShapeDtypeStruct((num_steps, n, d), jnp.float32),
                       jax.ShapeDtypeStruct((num_steps, n, d), jnp.float32),
                       jax.ShapeDtypeStruct((num_steps, 8, HIDDEN_PAD), jnp.float32)),
            grid=(num_steps,),
            in_specs=[
                pl.BlockSpec(memory_space=pltpu.MemorySpace.SMEM),        # scal
                pl.BlockSpec((n, d), lambda s: (0, 0)),                   # x0
                pl.BlockSpec((n, d), lambda s: (0, 0)),                   # v0
                pl.BlockSpec((d, d), lambda s: (0, 0)),                   # A (Hessian)
                pl.BlockSpec((2, HIDDEN_PAD), lambda s: (0, 0)),          # w1
                pl.BlockSpec((2, HIDDEN_PAD), lambda s: (0, 0)),          # b1
                pl.BlockSpec((2, HIDDEN_PAD, HIDDEN_PAD), lambda s: (0, 0, 0)),  # w2t
                pl.BlockSpec((2, HIDDEN_PAD), lambda s: (0, 0)),          # b2
                pl.BlockSpec((2, HIDDEN_PAD, HIDDEN_PAD), lambda s: (0, 0, 0)),  # w3bc
            ],
            out_specs=(
                pl.BlockSpec((1, n, d), lambda s: (s, 0, 0)),
                pl.BlockSpec((1, n, d), lambda s: (s, 0, 0)),
                pl.BlockSpec((1, 8, HIDDEN_PAD), lambda s: (s, 0, 0)),
            ),
            scratch_shapes=[pltpu.VMEM((n, d), jnp.float32),
                            pltpu.VMEM((n, d), jnp.float32)],
            compiler_params=pltpu.CompilerParams(
                dimension_semantics=("arbitrary",)),
        )(scal, x0, v0, a, w1, b1, w2t, b2, w3bc)
        # one lane-dense row of indicators per step (lanes 0..7 used)
        return dx_all, dv_all, ind_all[:, 0, :]

    return rollout


def make_forward(h, alpha, threshold):
    """Single evaluation of DIN_AVD_augmented.forward (grid of one step)."""
    rollout = make_rollout(h, alpha, threshold, num_steps=1)

    @jax.jit
    def forward(t, x, v, packed, a, lam):
        dx_all, dv_all, ind_all = rollout(t, x, v, packed, a, lam)
        ind = ind_all[0]
        # shapes match the torch module: indices 2,3,6,7 scalar; 4,5 shape (1,)
        return (dx_all[0], dv_all[0],
                ind[0], ind[1],
                ind[2].reshape(1), ind[3].reshape(1),
                ind[4], ind[5])

    return forward


# ----------------------------- parameter setup -------------------------------

def _xavier_normal(key, shape):
    fan_out, fan_in = shape
    std = math.sqrt(2.0 / (fan_in + fan_out))
    return (std * jax.random.normal(key, shape)).astype(jnp.float32)


def init_net_params(key, hidden=HIDDEN):
    """Raw NetWithDeriv params (fc1 (h,1), fc2 (h,h), fc3 (1,h); zero biases)."""
    k1, k2, k3 = jax.random.split(key, 3)
    w1 = _xavier_normal(k1, (hidden, 1))
    w2 = _xavier_normal(k2, (hidden, hidden))
    w3 = _xavier_normal(k3, (1, hidden))
    b1 = jnp.zeros((hidden,), jnp.float32)
    b2 = jnp.zeros((hidden,), jnp.float32)
    b3 = jnp.zeros((), jnp.float32)
    return (w1, b1, w2, b2, w3, b3)


def pack_net_params(raw_beta, raw_gamma, hidden=HIDDEN, hp=HIDDEN_PAD):
    """Pack beta & gamma NetWithDeriv for the kernel.

    fc1/fc2 are kept per-net (no block-diagonal zero halves), pre-transposed to
    (in, out) and zero-padded 50 -> 128.  fc3 is lane-broadcast
    (w3bc[net, i, :] = fc3.weight[0, i]) so the net value/derivative land as
    full-lane vectors straight out of the MXU.  Padding is zero -> exact.
    """
    w1b, b1b, w2b, b2b, w3b, b3b = raw_beta
    w1g, b1g, w2g, b2g, w3g, b3g = raw_gamma

    w1 = jnp.zeros((2, hp), jnp.float32)
    w1 = w1.at[0, :hidden].set(w1b[:, 0]).at[1, :hidden].set(w1g[:, 0])
    b1 = jnp.zeros((2, hp), jnp.float32)
    b1 = b1.at[0, :hidden].set(b1b).at[1, :hidden].set(b1g)

    w2t = jnp.zeros((2, hp, hp), jnp.float32)
    w2t = w2t.at[0, :hidden, :hidden].set(w2b.T)
    w2t = w2t.at[1, :hidden, :hidden].set(w2g.T)
    b2 = jnp.zeros((2, hp), jnp.float32)
    b2 = b2.at[0, :hidden].set(b2b).at[1, :hidden].set(b2g)

    w3bc = jnp.zeros((2, hp, hp), jnp.float32)
    w3bc = w3bc.at[0, :hidden, :].set(jnp.broadcast_to(w3b[0, :, None], (hidden, hp)))
    w3bc = w3bc.at[1, :hidden, :].set(jnp.broadcast_to(w3g[0, :, None], (hidden, hp)))

    b3 = jnp.stack([b3b, b3g])
    return (w1, b1, w2t, b2, w3bc, b3)


# --------------------------- pure-JAX reference -------------------------------

def _net_ref(t, params):
    w1, b1, w2, b2, w3, b3 = params
    pe = lax.Precision.HIGHEST
    out1 = t * w1[:, 0] + b1
    h1 = jnp.where(out1 > 0, out1, jnp.exp(jnp.minimum(out1, 0.0)) - 1.0)
    out2 = jnp.dot(w2, h1, precision=pe) + b2
    h2 = jnp.where(out2 > 0, out2, jnp.exp(jnp.minimum(out2, 0.0)) - 1.0)
    val = jnp.dot(w3[0], h2, precision=pe) + b3
    g1 = jnp.minimum(jnp.exp(out1), 1.0)
    d0 = g1 * w1[:, 0]
    d1 = jnp.dot(w2, d0, precision=pe)
    g2 = jnp.minimum(jnp.exp(out2), 1.0)
    d2 = g2 * d1
    dval = jnp.dot(w3[0], d2, precision=pe)
    return val, dval


def forward_ref(t, x, v, raw_beta, raw_gamma, a, lam, h, alpha, thr):
    pe = lax.Precision.HIGHEST
    bt, dbt = _net_ref(t, raw_beta)
    gt, _ = _net_ref(t, raw_gamma)
    bth, dbth = _net_ref(t + h, raw_beta)
    gth, _ = _net_ref(t + h, raw_gamma)
    df = jnp.dot(x, a, precision=pe)
    dx = -x + v - bt * df
    dv = (1.0 - alpha / t) * dx + (dbt - gt) * df
    s1 = (bt - h * gt / 2.0) * lam + alpha / t - 2.0 / h
    s2 = (h * gt - bt) * lam - alpha / t
    c1 = bt / t + dbt - gt
    w = -c1
    w_ = -(bth / (t + h) + dbth - gth)
    c2 = t * (w_ - w) / h - (alpha - 3.0) * w
    z = jnp.float32(0.0)
    return (dx, dv,
            jnp.maximum(-bt, z), jnp.maximum(-gt, z),
            jnp.maximum(s1 + thr / t, z), jnp.maximum(s2 + thr / t, z),
            jnp.maximum(c1, z), jnp.maximum(c2, z))


# ------------------------------------ main -----------------------------------

if __name__ == "__main__":
    key = jax.random.PRNGKey(0)
    k_beta, k_gamma, k_a, k_x, k_v = jax.random.split(key, 5)

    N, D = 8, 128
    raw_beta = init_net_params(k_beta)
    raw_gamma = init_net_params(k_gamma)
    packed = pack_net_params(raw_beta, raw_gamma)

    # gradFunc(x) = x @ A : gradient of the quadratic f(x) = 0.5 * tr(x A x^T)
    m_ = jax.random.normal(k_a, (D, D), jnp.float32) / math.sqrt(D)
    a_mat = 0.5 * (m_ + m_.T) + jnp.eye(D, dtype=jnp.float32)

    x = jax.random.normal(k_x, (N, D), jnp.float32)
    v = jax.random.normal(k_v, (N, D), jnp.float32)

    t0, h, alpha, threshold = 1.0, 0.04, 6.0, 10.0
    t = t0 + 5 * h

    # Lambda hoisted: constant Hessian for the quadratic gradFunc -> compute once.
    lam = dominant_eig(a_mat)

    # --- single forward evaluation (matches DIN_AVD_augmented.forward) ---
    forward = make_forward(h=h, alpha=alpha, threshold=threshold)
    outs = jax.block_until_ready(forward(jnp.float32(t), x, v, packed, a_mat, lam))
    assert outs[0].shape == (N, D) and outs[1].shape == (N, D)
    assert outs[4].shape == (1,) and outs[5].shape == (1,)
    assert all(bool(jnp.isfinite(o).all()) for o in outs)

    # correctness vs a pure-JAX reference of the torch forward
    ref = forward_ref(jnp.float32(t), x, v, raw_beta, raw_gamma, a_mat, lam,
                      h, alpha, threshold)
    for got, want in zip(outs, ref):
        assert bool(jnp.allclose(jnp.ravel(got), jnp.ravel(jnp.asarray(want)),
                                 rtol=5e-3, atol=5e-3))

    # --- fused multi-step trajectory: one pallas_call for the whole loop ---
    num_steps = 32
    rollout = make_rollout(h=h, alpha=alpha, threshold=threshold,
                           num_steps=num_steps)
    dx_all, dv_all, ind_all = jax.block_until_ready(
        rollout(jnp.float32(t0), x, v, packed, a_mat, lam))
    assert dx_all.shape == (num_steps, N, D)
    assert dv_all.shape == (num_steps, N, D)
    assert ind_all.shape == (num_steps, HIDDEN_PAD)
    assert bool(jnp.isfinite(dx_all).all()) and bool(jnp.isfinite(dv_all).all())
    assert bool(jnp.isfinite(ind_all[:, :N_IND]).all())

    print("KERNEL_OK")
</pallas_src>

<mosaic_0001>
module attributes {stable_mosaic.version = 11 : i64} {
  func.func @_dominant_eig_kernel(%arg0: memref<128x128xf32, #tpu.memory_space<vmem>>, %arg1: memref<8x1xf32, #tpu.memory_space<vmem>>) attributes {dimension_semantics = [], scalar_prefetch = 0 : i64, scratch_operands = 0 : i64, tpu.core_type = #tpu.core_type<tc>} {
    %c0 = arith.constant 0 : index
    %c0_0 = arith.constant 0 : index
    %0 = vector.load %arg0[%c0, %c0_0] : memref<128x128xf32, #tpu.memory_space<vmem>>, vector<128x128xf32>
    %1 = tpu.iota {dimensions = array<i32: 0>} : vector<8x128xi32>
    %2 = arith.sitofp %1 : vector<8x128xi32> to vector<8x128xf32>
    %3 = tpu.iota {dimensions = array<i32: 1>} : vector<8x128xi32>
    %4 = arith.sitofp %3 : vector<8x128xi32> to vector<8x128xf32>
    %cst = arith.constant 5.000000e-02 : f32
    %5 = vector.broadcast %cst : f32 to vector<8x128xf32>
    %6 = arith.mulf %5, %2 : vector<8x128xf32>
    %cst_1 = arith.constant 1.000000e+00 : f32
    %7 = vector.broadcast %cst_1 : f32 to vector<8x128xf32>
    %8 = arith.addf %7, %6 : vector<8x128xf32>
    %cst_2 = arith.constant 2.000000e-02 : f32
    %9 = vector.broadcast %cst_2 : f32 to vector<8x128xf32>
    %10 = arith.mulf %9, %4 : vector<8x128xf32>
    %11 = arith.addf %8, %10 : vector<8x128xf32>
    %cst_3 = arith.constant 3.000000e-03 : f32
    %12 = vector.broadcast %cst_3 : f32 to vector<8x128xf32>
    %13 = arith.mulf %12, %2 : vector<8x128xf32>
    %14 = arith.mulf %13, %4 : vector<8x128xf32>
    %15 = arith.addf %11, %14 : vector<8x128xf32>
    %c0_i32 = arith.constant 0 : i32
    %c48_i32 = arith.constant 48 : i32
    %16 = arith.addi %c0_i32, %c48_i32 : i32
    %c1_i32 = arith.constant 1 : i32
    %17 = scf.for %arg2 = %c0_i32 to %16 step %c1_i32 iter_args(%arg3 = %15) -> (vector<8x128xf32>)  : i32 {
      %cst_9 = arith.constant dense<0.000000e+00> : vector<8x128xf32>
      %27 = tpu.matmul %arg3, %0, %cst_9 {dimension_numbers = #tpu.dot_dimension_numbers<[1], [0], [0], [1], [0, 0, 1, 1], [], []>} : vector<8x128xf32>, vector<128x128xf32>, vector<8x128xf32> -> vector<8x128xf32>
      %28 = arith.mulf %27, %27 : vector<8x128xf32>
      %cst_10 = arith.constant dense<0.000000e+00> : vector<8xf32>
      %29 = vector.multi_reduction <add>, %28, %cst_10 [1] : vector<8x128xf32> to vector<8xf32>
      %30 = vector.shape_cast %29 : vector<8xf32> to vector<8x1xf32>
      %cst_11 = arith.constant 1.000000e-30 : f32
      %31 = vector.broadcast %cst_11 : f32 to vector<8x1xf32>
      %32 = arith.addf %30, %31 : vector<8x1xf32>
      %33 = math.rsqrt %32 : vector<8x1xf32>
      %34 = vector.broadcast %33 : vector<8x1xf32> to vector<8x128xf32>
      %35 = arith.mulf %27, %34 : vector<8x128xf32>
      scf.yield %35 : vector<8x128xf32>
    }
    %cst_4 = arith.constant dense<0.000000e+00> : vector<8x128xf32>
    %18 = tpu.matmul %17, %0, %cst_4 {dimension_numbers = #tpu.dot_dimension_numbers<[1], [0], [0], [1], [0, 0, 1, 1], [], []>} : vector<8x128xf32>, vector<128x128xf32>, vector<8x128xf32> -> vector<8x128xf32>
    %19 = arith.mulf %17, %18 : vector<8x128xf32>
    %cst_5 = arith.constant dense<0.000000e+00> : vector<8xf32>
    %20 = vector.multi_reduction <add>, %19, %cst_5 [1] : vector<8x128xf32> to vector<8xf32>
    %21 = vector.shape_cast %20 : vector<8xf32> to vector<8x1xf32>
    %22 = arith.mulf %17, %17 : vector<8x128xf32>
    %cst_6 = arith.constant dense<0.000000e+00> : vector<8xf32>
    %23 = vector.multi_reduction <add>, %22, %cst_6 [1] : vector<8x128xf32> to vector<8xf32>
    %24 = vector.shape_cast %23 : vector<8xf32> to vector<8x1xf32>
    %25 = arith.divf %21, %24 : vector<8x1xf32>
    %c0_7 = arith.constant 0 : index
    %c0_8 = arith.constant 0 : index
    %26 = vector.load %arg1[%c0_7, %c0_8] : memref<8x1xf32, #tpu.memory_space<vmem>>, vector<8x1xf32>
    tpu.vector_store %arg1[%c0_7, %c0_8], %25 {strides = array<i32>} : memref<8x1xf32, #tpu.memory_space<vmem>>, vector<8x1xf32>,
    return
  }
}

</mosaic_0001>

<llo_original>
// kernel: dominant_eig.1
$region0: #{dominant_eig.1}
  #allocation0 [shape = 'u32[]', space=smem, size = 0x4, offset = 0x4, fixed_abs, tag = 'smem constant byte address 0x4 - core index']
  #allocation1 [shape = 'u32[144,128]{1,0:T(1,128)}', space=vmem, size = 0x12000, scoped, tag = 'internal scratch']
  %s0 = inlined_call_operand.hbm [shape: f32[128,128], index: 0, kind: input, shape index: {}]
  %s1 = inlined_call_operand.vmem [shape: f32[8,1], index: 1, kind: output, shape index: {}]
  %s2 = sld [smem:[#allocation0]]
  $region25: #{dominant_eig.1} parent=0
    _
  %s4 = ssub.s32 1, %s2
  %s5 = scalar_select 0, %s4, %s2
  $region1: #{dominant_eig.1} parent=0
    #allocation2 [shape = 'u8[65536]{0}', space=vmem, size = 0x10000, scoped, tag = 'input window, operand 0, single buffered']
    #allocation3 [shape = 's32[1]{0}', space=sflag, size = 0x4, scoped, tag = 'scoped memory for dominant_eig.1']
    %6 = vsyncpa [#allocation3], 0
    // Predicated region
    $region2: #{dominant_eig.1} parent=1 // pred_check
      _
    $region3: #{dominant_eig.1} parent=1 // pred_check_branch
      %8 = sbr.rel (0) target = $region5
    $region4: #{dominant_eig.1} parent=1 // pred_region
      %s10 = ssub.s32 2048, 2048
      %11 = vsyncadd [#allocation3], %s10
      %s12 = sshll.u32 [#allocation2], 4
      %s13 = int_to_ptr.vmem [resolvable:$true] %s12
      %18 = dma.hbm_to_vmem [thread:$0]  %s0, 2048, %s13, [#allocation3], 128, 128, 8
    $region5: #{dominant_eig.1} parent=1 // pred_fallthru
      _
    // Predicated region
    $region6: #{dominant_eig.1} parent=1 // pred_check
      _
    $region7: #{dominant_eig.1} parent=1 // pred_check_branch
      %20 = sbr.rel (0) target = $region9
    $region8: #{dominant_eig.1} parent=1 // pred_region
      %21 = dma.done [#allocation3], 2048
    $region9: #{dominant_eig.1} parent=1 // pred_fallthru
      _
    %v22 = vld [vmem:[#allocation2] sm:$0xff]
    %v23 = vld [vmem:[#allocation2 + $0x8] sm:$0xff]
    %v24 = vld [vmem:[#allocation2 + $0x10] sm:$0xff]
    %v25 = vld [vmem:[#allocation2 + $0x18] sm:$0xff]
    %v26 = vld [vmem:[#allocation2 + $0x20] sm:$0xff]
    %v27 = vld [vmem:[#allocation2 + $0x28] sm:$0xff]
    %v28 = vld [vmem:[#allocation2 + $0x30] sm:$0xff]
    %v29 = vld [vmem:[#allocation2 + $0x38] sm:$0xff]
    %v30 = vld [vmem:[#allocation2 + $0x40] sm:$0xff]
    %v31 = vld [vmem:[#allocation2 + $0x48] sm:$0xff]
    %v32 = vld [vmem:[#allocation2 + $0x50] sm:$0xff]
    %v33 = vld [vmem:[#allocation2 + $0x58] sm:$0xff]
    %v34 = vld [vmem:[#allocation2 + $0x60] sm:$0xff]
    %v35 = vld [vmem:[#allocation2 + $0x68] sm:$0xff]
    %v36 = vld [vmem:[#allocation2 + $0x70] sm:$0xff]
    %v37 = vld [vmem:[#allocation2 + $0x78] sm:$0xff]
    %v38 = vlaneseq
    %v39 = vshrl.u32 %v38, 7
    %v40 = vcvt.s32.f32 %v39
    %v41 = vlaneseq
    %v42 = vand.u32 %v41, 127
    %v43 = vcvt.s32.f32 %v42
    %v44 = vmul.f32 %v40, 0.05
    %v45 = vadd.f32 %v44, 1.0
    %v46 = vmul.f32 %v43, 0.02
    %v47 = vadd.f32 %v45, %v46
    %v48 = vmul.f32 %v40, 0.003
    %v49 = vmul.f32 %v48, %v43
    %v50 = vadd.f32 %v47, %v49
    loop: start=0, step=1, limit=48
    $region10: #{dominant_eig.1} parent=1 // loop_pre_header
      _
    $region11: #{dominant_eig.1} parent=1 // loop_header
      %s52 = sphi 0, %s56
      %p53 = scmp.ge.s32.totalorder %s52, 48
      %v57 = vphi %v50, %v133
    $region12: #{dominant_eig.1} parent=1 // loop_header_branch
      %55 = sbr.rel (%p53) target = $region16
    $region13: #{dominant_eig.1} parent=1 // loop_body
      %58 = vmatprep.subr.mxu0 0.0
      %59 = vmatpush1.msra.mxu0 %v22
      %60 = vmatprep.subr.mxu0 0.0
      %61 = vmatpush1.msra.mxu0 %v23
      %62 = vmatprep.subr.mxu0 0.0
      %63 = vmatpush1.msra.mxu0 %v24
      %64 = vmatprep.subr.mxu0 0.0
      %65 = vmatpush1.msra.mxu0 %v25
      %66 = vmatprep.subr.mxu0 0.0
      %67 = vmatpush1.msra.mxu0 %v26
      %68 = vmatprep.subr.mxu0 0.0
      %69 = vmatpush1.msra.mxu0 %v27
      %70 = vmatprep.subr.mxu0 0.0
      %71 = vmatpush1.msra.mxu0 %v28
      %72 = vmatprep.subr.mxu0 0.0
      %73 = vmatpush1.msra.mxu0 %v29
      %74 = vmatprep.subr.mxu0 0.0
      %75 = vmatpush1.msra.mxu0 %v30
      %76 = vmatprep.subr.mxu0 0.0
      %77 = vmatpush1.msra.mxu0 %v31
      %78 = vmatprep.subr.mxu0 0.0
      %79 = vmatpush1.msra.mxu0 %v32
      %80 = vmatprep.subr.mxu0 0.0
      %81 = vmatpush1.msra.mxu0 %v33
      %82 = vmatprep.subr.mxu0 0.0
      %83 = vmatpush1.msra.mxu0 %v34
      %84 = vmatprep.subr.mxu0 0.0
      %85 = vmatpush1.msra.mxu0 %v35
      %86 = vmatprep.subr.mxu0 0.0
      %87 = vmatpush1.msra.mxu0 %v36
      %88 = vmatprep.subr.mxu0 0.0
      %89 = vmatpush1.msra.mxu0 %v37
      %90 = vmatprep.subr.mxu0 0.0
      %91 = vmatpush1.msra.mxu0 0.0
      %92 = vmatprep.subr.mxu0 0.0
      %93 = vmatpush1.msra.mxu0 0.0
      %94 = vmatprep.subr.mxu0 0.0
      %95 = vmatpush1.msra.mxu0 0.0
      %96 = vmatprep.subr.mxu0 0.0
      %97 = vmatpush1.msra.mxu0 0.0
      %98 = vmatprep.subr.mxu0 0.0
      %99 = vmatpush1.msra.mxu0 0.0
      %100 = vmatprep.subr.mxu0 0.0
      %101 = vmatpush1.msra.mxu0 0.0
      %102 = vmatprep.subr.mxu0 0.0
      %103 = vmatpush1.msra.mxu0 0.0
      %104 = vmatprep.subr.mxu0 0.0
      %105 = vmatpush1.msra.mxu0 0.0
      %106 = vmatprep.subr.mxu0 0.0
      %107 = vmatpush1.msra.mxu0 0.0
      %108 = vmatprep.subr.mxu0 0.0
      %109 = vmatpush1.msra.mxu0 0.0
      %110 = vmatprep.subr.mxu0 0.0
      %111 = vmatpush1.msra.mxu0 0.0
      %112 = vmatprep.subr.mxu0 0.0
      %113 = vmatpush1.msra.mxu0 0.0
      %114 = vmatprep.subr.mxu0 0.0
      %115 = vmatpush1.msra.mxu0 0.0
      %116 = vmatprep.subr.mxu0 0.0
      %117 = vmatpush1.msra.mxu0 0.0
      %118 = vmatprep.subr.mxu0 0.0
      %119 = vmatpush1.msra.mxu0 0.0
      %120 = vmatprep.subr.mxu0 0.0
      %121 = vmatpush1.msra.mxu0 0.0
      %122 = vmatprep.mubr.f32.mxu0 0.0
      %123 = vmatmul.mubr.f32.gmra.mrb[0].mxu0 %v57
      %v124 = vpop.f32.mrb[0].mxu0
      %v125 = vadd.f32 0.0, %v124
      %v126 = vpop.f32.mrb[0].mxu0
      %127 = vdwg.mxu0
      %v128 = vmul.f32 %v125, %v125
      %129 = vadd.xlane.f32.xlu0 %v128
      %v130 = vpop.xlane.xlu0 %129
      %v131 = vadd.f32 %v130, 1e-30
      %v132 = vrsqrt.pop %v131
      %v133 = vmul.f32 %v125, %v132
    $region14: #{dominant_eig.1} parent=1 // loop_footer
      %s56 = sadd.s32 1, %s52
    $region15: #{dominant_eig.1} parent=1 // loop_footer_branch
      %51 = sbr.rel target = $region11
    $region16: #{dominant_eig.1} parent=1 // loop_exit
      _
    %134 = vmatprep.subr.mxu0 0.0
    %135 = vmatpush1.msra.mxu0 %v22
    %136 = vmatprep.subr.mxu0 0.0
    %137 = vmatpush1.msra.mxu0 %v23
    %138 = vmatprep.subr.mxu0 0.0
    %139 = vmatpush1.msra.mxu0 %v24
    %140 = vmatprep.subr.mxu0 0.0
    %141 = vmatpush1.msra.mxu0 %v25
    %142 = vmatprep.subr.mxu0 0.0
    %143 = vmatpush1.msra.mxu0 %v26
    %144 = vmatprep.subr.mxu0 0.0
    %145 = vmatpush1.msra.mxu0 %v27
    %146 = vmatprep.subr.mxu0 0.0
    %147 = vmatpush1.msra.mxu0 %v28
    %148 = vmatprep.subr.mxu0 0.0
    %149 = vmatpush1.msra.mxu0 %v29
    %150 = vmatprep.subr.mxu0 0.0
    %151 = vmatpush1.msra.mxu0 %v30
    %152 = vmatprep.subr.mxu0 0.0
    %153 = vmatpush1.msra.mxu0 %v31
    %154 = vmatprep.subr.mxu0 0.0
    %155 = vmatpush1.msra.mxu0 %v32
    %156 = vmatprep.subr.mxu0 0.0
    %157 = vmatpush1.msra.mxu0 %v33
    %158 = vmatprep.subr.mxu0 0.0
    %159 = vmatpush1.msra.mxu0 %v34
    %160 = vmatprep.subr.mxu0 0.0
    %161 = vmatpush1.msra.mxu0 %v35
    %162 = vmatprep.subr.mxu0 0.0
    %163 = vmatpush1.msra.mxu0 %v36
    %164 = vmatprep.subr.mxu0 0.0
    %165 = vmatpush1.msra.mxu0 %v37
    %166 = vmatprep.subr.mxu0 0.0
    %167 = vmatpush1.msra.mxu0 0.0
    %168 = vmatprep.subr.mxu0 0.0
    %169 = vmatpush1.msra.mxu0 0.0
    %170 = vmatprep.subr.mxu0 0.0
    %171 = vmatpush1.msra.mxu0 0.0
    %172 = vmatprep.subr.mxu0 0.0
    %173 = vmatpush1.msra.mxu0 0.0
    %174 = vmatprep.subr.mxu0 0.0
    %175 = vmatpush1.msra.mxu0 0.0
    %176 = vmatprep.subr.mxu0 0.0
    %177 = vmatpush1.msra.mxu0 0.0
    %178 = vmatprep.subr.mxu0 0.0
    %179 = vmatpush1.msra.mxu0 0.0
    %180 = vmatprep.subr.mxu0 0.0
    %181 = vmatpush1.msra.mxu0 0.0
    %182 = vmatprep.subr.mxu0 0.0
    %183 = vmatpush1.msra.mxu0 0.0
    %184 = vmatprep.subr.mxu0 0.0
    %185 = vmatpush1.msra.mxu0 0.0
    %186 = vmatprep.subr.mxu0 0.0
    %187 = vmatpush1.msra.mxu0 0.0
    %188 = vmatprep.subr.mxu0 0.0
    %189 = vmatpush1.msra.mxu0 0.0
    %190 = vmatprep.subr.mxu0 0.0
    %191 = vmatpush1.msra.mxu0 0.0
    %192 = vmatprep.subr.mxu0 0.0
    %193 = vmatpush1.msra.mxu0 0.0
    %194 = vmatprep.subr.mxu0 0.0
    %195 = vmatpush1.msra.mxu0 0.0
    %196 = vmatprep.subr.mxu0 0.0
    %197 = vmatpush1.msra.mxu0 0.0
    %198 = vmatprep.mubr.f32.mxu0 0.0
    %199 = vmatmul.mubr.f32.gmra.mrb[0].mxu0 %v57
    %v200 = vpop.f32.mrb[0].mxu0
    %v201 = vadd.f32 0.0, %v200
    %v202 = vpop.f32.mrb[0].mxu0
    %203 = vdwg.mxu0
    %v204 = vmul.f32 %v57, %v201
    %205 = vadd.xlane.f32.xlu0 %v204
    %v206 = vpop.xlane.xlu0 %205
    %v207 = vmul.f32 %v57, %v57
    %208 = vadd.xlane.f32.xlu0 %v207
    %v209 = vpop.xlane.xlu0 %208
    %v210 = vrcp.pop %v209
    %v211 = vmul.f32 %v206, %v210
    %vm212 = vcmask 7168
    %213 = vst.msk [vmem:[%s1] sm:$0xff] %vm212, %v211
    // Predicated region
    $region17: #{dominant_eig.1} parent=1 // pred_check
      _
    $region18: #{dominant_eig.1} parent=1 // pred_check_branch
      %215 = sbr.rel (0) target = $region20
    $region19: #{dominant_eig.1} parent=1 // pred_region
      _
    $region20: #{dominant_eig.1} parent=1 // pred_fallthru
      _
    // Predicated region
    $region21: #{dominant_eig.1} parent=1 // pred_check
      _
    $region22: #{dominant_eig.1} parent=1 // pred_check_branch
      %217 = sbr.rel (0) target = $region24
    $region23: #{dominant_eig.1} parent=1 // pred_region
      _
    $region24: #{dominant_eig.1} parent=1 // pred_fallthru
      _
    %218 = vsyncpa [#allocation3], 1

</llo_original>
